<compile_context>
chip_gen: v7x
topology: tpu7x:2x2x1
jax: 0.10.0
libtpu: 0.0.40
codegen_flags: <defaults>
</compile_context>

<pallas_src>
import functools

import jax
import jax.numpy as jnp
from jax.experimental import pallas as pl
from jax.experimental.pallas import tpu as pltpu


def _bitonic_sort_halves(v, n):
    """Sort rows [0, n) and rows [n, 2n) of v (shape (2n, L)) independently,
    ascending along axis 0, with a full-tile bitonic network (XLU rolls +
    broadcast masks + VPU min/max selects).

    Pairs (i, i^j) never cross the half boundary because j < n, so both halves
    are sorted by the same vector ops.
    """
    if n <= 1:
        return v
    n2 = 2 * n
    row = jax.lax.broadcasted_iota(jnp.int32, v.shape, 0)
    il = row & (n - 1)                       # local row index within each half

    # Precompute the log2(n) distinct b_j masks once; reuse across all stages.
    j_mask = {}
    j = 1
    while j < n:
        j_mask[j] = (il & j) != 0
        j *= 2

    # TODO(synk): for n > ~32 express the stage schedule as a lax.fori_loop to
    # bound trace size / vreg live ranges instead of this static unroll.
    k = 2
    while k <= n:
        # b_k depends only on k -> hoisted out of the inner loop; the final
        # merge (k == n) is all-ascending, so skip the XOR entirely there.
        b_k = None if k == n else ((il & k) != 0)
        j = k // 2
        while j >= 1:
            b_j = j_mask[j]
            # down[i] = v[(i+j) % 2n], up[i] = v[(i-j) % 2n]  (np.roll semantics)
            down = pltpu.roll(v, shift=n2 - j, axis=0)
            up = pltpu.roll(v, shift=j, axis=0)
            partner = jnp.where(b_j, up, down)
            lo = jnp.minimum(v, partner)
            hi = jnp.maximum(v, partner)
            want_max = b_j if b_k is None else jnp.logical_xor(b_j, b_k)
            v = jnp.where(want_max, hi, lo)
            j //= 2
        k *= 2
    return v


def _esw_kernel(x_ref, y_ref, th_ref, o_ref, acc_ref, *, n, p):
    k = pl.program_id(0)

    @pl.when(k == 0)
    def _():
        acc_ref[...] = jnp.zeros_like(acc_ref)

    # Project both point sets with this D tile of theta.  The contraction uses
    # theta's last dim directly (x @ theta.T) -- no wrapper-side transpose.
    dims = (((1,), (1,)), ((), ()))
    acc_ref[0:n, :] += jax.lax.dot_general(
        x_ref[...], th_ref[...], dims, preferred_element_type=jnp.float32)
    acc_ref[n:, :] += jax.lax.dot_general(
        y_ref[...], th_ref[...], dims, preferred_element_type=jnp.float32)

    # Sort + softmax epilogue only once, after the last D tile.
    @pl.when(k == pl.num_programs(0) - 1)
    def _():
        proj = acc_ref[...]                         # (2N, L) f32
        srt = _bitonic_sort_halves(proj, n)

        # 1-D Wasserstein-p per projection: sum_i |Xs[i] - Ys[i]|^p (full-tile).
        d = srt[0:n, :] - srt[n:, :]
        if p == 2:
            wd = jnp.sum(d * d, axis=0, keepdims=True)            # (1, L)
        elif p % 2 == 0:
            wd = jnp.sum(d ** p, axis=0, keepdims=True)
        else:
            wd = jnp.sum(jnp.abs(d) ** p, axis=0, keepdims=True)

        # Softmax over projections; exact arithmetic (reductions are tiny).
        m = jnp.max(wd, axis=1, keepdims=True)
        e = jnp.exp(wd - m)
        sum_e = jnp.sum(e, axis=1, keepdims=True)                 # (1, 1)
        num = jnp.sum(e * wd, axis=1, keepdims=True)              # (1, 1)
        loss = num / (sum_e * float(n))                           # exact divide

        if p == 1:
            out = loss
        elif p == 2:
            out = jnp.sqrt(loss)
        else:
            out = jnp.exp(jnp.log(jnp.maximum(loss, 1e-30)) / float(p))
        o_ref[...] = out.astype(o_ref.dtype)


def energy_sliced_wasserstein(X, Y, theta, *, p=2):
    """Pallas implementation of EnergySlicedWasserstein.forward.

    X, Y:   (N, D), N must be a power of two.
    theta:  (L, D), rows already L2-normalized (the random projections).
    """
    N, D = X.shape
    L = theta.shape[0]
    assert Y.shape == (N, D) and theta.shape == (L, D)
    assert N > 0 and (N & (N - 1)) == 0, "batch size must be a power of two"
    # TODO(synk): non-power-of-two N needs padding to the next pow2 with sentinel keys.

    # D tile: largest of {512, 256, 128} that divides D exactly (keeps the
    # contraction garbage-free); otherwise the whole of D in one step.
    tile_d = D
    for cand in (512, 256, 128):
        if D % cand == 0:
            tile_d = cand
            break
    n_k = D // tile_d

    itemsize = X.dtype.itemsize
    # Double-buffered input tiles + resident f32 accumulator + ~8 sort temps.
    est = (2 * (2 * N + L) * tile_d * itemsize
           + 2 * N * L * 4
           + 8 * 2 * N * L * 4)
    vmem_limit = int(min(max(2 * est, 32 * 1024 * 1024), 64 * 1024 * 1024))
    # TODO(synk): on v6e the cap can be raised toward ~100 MiB for bigger tiles;
    # on v7x add a leading 'parallel' grid axis over L tiles (per-tile online-
    # softmax partials combined in an epilogue) so both TensorCores are used.

    cost = pl.CostEstimate(
        flops=2 * (2 * N) * D * L + 12 * (2 * N) * L * max(1, N.bit_length() ** 2),
        transcendentals=L + 2,
        bytes_accessed=(2 * N * D + L * D) * itemsize + 4,
    )

    out = pl.pallas_call(
        functools.partial(_esw_kernel, n=N, p=p),
        out_shape=jax.ShapeDtypeStruct((1, 1), jnp.float32),
        grid=(n_k,),
        in_specs=[
            pl.BlockSpec((N, tile_d), lambda k: (0, k)),
            pl.BlockSpec((N, tile_d), lambda k: (0, k)),
            pl.BlockSpec((L, tile_d), lambda k: (0, k)),
        ],
        out_specs=pl.BlockSpec((1, 1), lambda k: (0, 0)),
        scratch_shapes=[pltpu.VMEM((2 * N, L), jnp.float32)],
        compiler_params=pltpu.CompilerParams(
            dimension_semantics=("arbitrary",),
            vmem_limit_bytes=vmem_limit,
        ),
        cost_estimate=cost,
    )(X, Y, theta)
    return out[0, 0]


def _reference(X, Y, theta, p):
    Xp = X @ theta.T
    Yp = Y @ theta.T
    Xs = jnp.sort(Xp, axis=0)
    Ys = jnp.sort(Yp, axis=0)
    wd = jnp.sum(jnp.abs(Xs - Ys) ** p, axis=0)
    w = jax.nn.softmax(wd)
    loss = jnp.sum(w * wd) / X.shape[0]
    return loss ** (1.0 / p)


if __name__ == "__main__":
    key = jax.random.PRNGKey(0)
    k_x, k_y, k_t = jax.random.split(key, 3)

    N, D = 8, 32            # batch_size, features
    L, P = 100, 2           # num_projections, p (module defaults)

    X = jax.random.normal(k_x, (N, D), dtype=jnp.float32)
    Y = 0.5 * jax.random.normal(k_y, (N, D), dtype=jnp.float32) + 0.3

    # Deterministic stand-in for torch.randn(L, D) followed by row-normalization.
    theta = jax.random.normal(k_t, (L, D), dtype=jnp.float32)
    theta = theta / jnp.linalg.norm(theta, axis=1, keepdims=True)

    # p = 2 (module default)
    loss = energy_sliced_wasserstein(X, Y, theta, p=P)
    loss = jax.block_until_ready(loss)
    ref = _reference(X, Y, theta, P)
    assert jnp.allclose(loss, ref, rtol=1e-4, atol=1e-6), (loss, ref)

    # Also exercise the odd-p (abs) path.
    loss1 = energy_sliced_wasserstein(X, Y, theta, p=1)
    loss1 = jax.block_until_ready(loss1)
    ref1 = _reference(X, Y, theta, 1)
    assert jnp.allclose(loss1, ref1, rtol=1e-4, atol=1e-6), (loss1, ref1)

    print("KERNEL_OK")
</pallas_src>

<mosaic_0001>
module attributes {stable_mosaic.version = 11 : i64} {
  func.func @_esw_kernel(%arg0: i32, %arg1: memref<8x32xf32, #tpu.memory_space<vmem>>, %arg2: memref<8x32xf32, #tpu.memory_space<vmem>>, %arg3: memref<100x32xf32, #tpu.memory_space<vmem>>, %arg4: memref<1x1xf32, #tpu.memory_space<vmem>>, %arg5: memref<16x100xf32, #tpu.memory_space<vmem>>) attributes {dimension_semantics = [#tpu.dimension_semantics<arbitrary>], iteration_bounds = array<i64: 1>, scalar_prefetch = 0 : i64, scratch_operands = 1 : i64, tpu.core_type = #tpu.core_type<tc>, window_params = [{transform_indices = @transform_0, window_bounds = array<i64: 8, 32>}, {transform_indices = @transform_1, window_bounds = array<i64: 8, 32>}, {transform_indices = @transform_2, window_bounds = array<i64: 100, 32>}, {pipeline_mode = #tpu.pipeline_mode<synchronous>, transform_indices = @transform_3, window_bounds = array<i64: 1, 1>}]} {
    %c0_i32 = arith.constant 0 : i32
    %0 = arith.cmpi eq, %arg0, %c0_i32 : i32
    %1 = arith.extui %0 : i1 to i32
    %c0_i32_0 = arith.constant 0 : i32
    %2 = arith.cmpi ne, %1, %c0_i32_0 : i32
    scf.if %2 {
      %cst_18 = arith.constant 0.000000e+00 : f32
      %18 = vector.broadcast %cst_18 : f32 to vector<16x100xf32>
      %c0_19 = arith.constant 0 : index
      %c0_20 = arith.constant 0 : index
      %19 = vector.load %arg5[%c0_19, %c0_20] : memref<16x100xf32, #tpu.memory_space<vmem>>, vector<16x100xf32>
      tpu.vector_store %arg5[%c0_19, %c0_20], %18 {strides = array<i32>} : memref<16x100xf32, #tpu.memory_space<vmem>>, vector<16x100xf32>,
    } else {
    }
    %c0 = arith.constant 0 : index
    %c0_1 = arith.constant 0 : index
    %3 = vector.load %arg5[%c0, %c0_1] : memref<16x100xf32, #tpu.memory_space<vmem>>, vector<8x100xf32>
    %c0_2 = arith.constant 0 : index
    %c0_3 = arith.constant 0 : index
    %4 = vector.load %arg1[%c0_2, %c0_3] : memref<8x32xf32, #tpu.memory_space<vmem>>, vector<8x32xf32>
    %c0_4 = arith.constant 0 : index
    %c0_5 = arith.constant 0 : index
    %5 = vector.load %arg3[%c0_4, %c0_5] : memref<100x32xf32, #tpu.memory_space<vmem>>, vector<100x32xf32>
    %cst = arith.constant dense<0.000000e+00> : vector<8x100xf32>
    %6 = tpu.matmul %4, %5, %cst {dimension_numbers = #tpu.dot_dimension_numbers<[1], [1], [0], [0], [0, 0, 1, 0], [], []>} : vector<8x32xf32>, vector<100x32xf32>, vector<8x100xf32> -> vector<8x100xf32>
    %7 = arith.addf %3, %6 : vector<8x100xf32>
    %c0_6 = arith.constant 0 : index
    %c0_7 = arith.constant 0 : index
    %8 = vector.load %arg5[%c0_6, %c0_7] : memref<16x100xf32, #tpu.memory_space<vmem>>, vector<8x100xf32>
    tpu.vector_store %arg5[%c0_6, %c0_7], %7 {strides = array<i32>} : memref<16x100xf32, #tpu.memory_space<vmem>>, vector<8x100xf32>,
    %c8 = arith.constant 8 : index
    %c0_8 = arith.constant 0 : index
    %9 = vector.load %arg5[%c8, %c0_8] : memref<16x100xf32, #tpu.memory_space<vmem>>, vector<8x100xf32>
    %c0_9 = arith.constant 0 : index
    %c0_10 = arith.constant 0 : index
    %10 = vector.load %arg2[%c0_9, %c0_10] : memref<8x32xf32, #tpu.memory_space<vmem>>, vector<8x32xf32>
    %c0_11 = arith.constant 0 : index
    %c0_12 = arith.constant 0 : index
    %11 = vector.load %arg3[%c0_11, %c0_12] : memref<100x32xf32, #tpu.memory_space<vmem>>, vector<100x32xf32>
    %cst_13 = arith.constant dense<0.000000e+00> : vector<8x100xf32>
    %12 = tpu.matmul %10, %11, %cst_13 {dimension_numbers = #tpu.dot_dimension_numbers<[1], [1], [0], [0], [0, 0, 1, 0], [], []>} : vector<8x32xf32>, vector<100x32xf32>, vector<8x100xf32> -> vector<8x100xf32>
    %13 = arith.addf %9, %12 : vector<8x100xf32>
    %c8_14 = arith.constant 8 : index
    %c0_15 = arith.constant 0 : index
    %14 = vector.load %arg5[%c8_14, %c0_15] : memref<16x100xf32, #tpu.memory_space<vmem>>, vector<8x100xf32>
    tpu.vector_store %arg5[%c8_14, %c0_15], %13 {strides = array<i32>} : memref<16x100xf32, #tpu.memory_space<vmem>>, vector<8x100xf32>,
    %c0_i32_16 = arith.constant 0 : i32
    %15 = arith.cmpi eq, %arg0, %c0_i32_16 : i32
    %16 = arith.extui %15 : i1 to i32
    %c0_i32_17 = arith.constant 0 : i32
    %17 = arith.cmpi ne, %16, %c0_i32_17 : i32
    scf.if %17 {
      %c0_18 = arith.constant 0 : index
      %c0_19 = arith.constant 0 : index
      %18 = vector.load %arg5[%c0_18, %c0_19] : memref<16x100xf32, #tpu.memory_space<vmem>>, vector<16x100xf32>
      %19 = tpu.iota {dimensions = array<i32: 0>} : vector<16x100xi32>
      %c7_i32 = arith.constant 7 : i32
      %20 = vector.broadcast %c7_i32 : i32 to vector<16x100xi32>
      %21 = arith.andi %19, %20 : vector<16x100xi32>
      %c1_i32 = arith.constant 1 : i32
      %22 = vector.broadcast %c1_i32 : i32 to vector<16x100xi32>
      %23 = arith.andi %21, %22 : vector<16x100xi32>
      %c0_i32_20 = arith.constant 0 : i32
      %24 = vector.broadcast %c0_i32_20 : i32 to vector<16x100xi32>
      %25 = arith.cmpi ne, %23, %24 : vector<16x100xi32>
      %c2_i32 = arith.constant 2 : i32
      %26 = vector.broadcast %c2_i32 : i32 to vector<16x100xi32>
      %27 = arith.andi %21, %26 : vector<16x100xi32>
      %c0_i32_21 = arith.constant 0 : i32
      %28 = vector.broadcast %c0_i32_21 : i32 to vector<16x100xi32>
      %29 = arith.cmpi ne, %27, %28 : vector<16x100xi32>
      %c4_i32 = arith.constant 4 : i32
      %30 = vector.broadcast %c4_i32 : i32 to vector<16x100xi32>
      %31 = arith.andi %21, %30 : vector<16x100xi32>
      %c0_i32_22 = arith.constant 0 : i32
      %32 = vector.broadcast %c0_i32_22 : i32 to vector<16x100xi32>
      %33 = arith.cmpi ne, %31, %32 : vector<16x100xi32>
      %c2_i32_23 = arith.constant 2 : i32
      %34 = vector.broadcast %c2_i32_23 : i32 to vector<16x100xi32>
      %35 = arith.andi %21, %34 : vector<16x100xi32>
      %c0_i32_24 = arith.constant 0 : i32
      %36 = vector.broadcast %c0_i32_24 : i32 to vector<16x100xi32>
      %37 = arith.cmpi ne, %35, %36 : vector<16x100xi32>
      %c15_i32 = arith.constant 15 : i32
      %38 = tpu.dynamic_rotate %18 by %c15_i32 dim 0 : vector<16x100xf32>, i32 -> vector<16x100xf32>
      %c1_i32_25 = arith.constant 1 : i32
      %39 = tpu.dynamic_rotate %18 by %c1_i32_25 dim 0 : vector<16x100xf32>, i32 -> vector<16x100xf32>
      %40 = arith.select %25, %39, %38 : vector<16x100xi1>, vector<16x100xf32>
      %41 = arith.minimumf %18, %40 : vector<16x100xf32>
      %42 = arith.maximumf %18, %40 : vector<16x100xf32>
      %43 = arith.xori %25, %37 : vector<16x100xi1>
      %44 = arith.select %43, %42, %41 : vector<16x100xi1>, vector<16x100xf32>
      %c4_i32_26 = arith.constant 4 : i32
      %45 = vector.broadcast %c4_i32_26 : i32 to vector<16x100xi32>
      %46 = arith.andi %21, %45 : vector<16x100xi32>
      %c0_i32_27 = arith.constant 0 : i32
      %47 = vector.broadcast %c0_i32_27 : i32 to vector<16x100xi32>
      %48 = arith.cmpi ne, %46, %47 : vector<16x100xi32>
      %c14_i32 = arith.constant 14 : i32
      %49 = tpu.dynamic_rotate %44 by %c14_i32 dim 0 : vector<16x100xf32>, i32 -> vector<16x100xf32>
      %c2_i32_28 = arith.constant 2 : i32
      %50 = tpu.dynamic_rotate %44 by %c2_i32_28 dim 0 : vector<16x100xf32>, i32 -> vector<16x100xf32>
      %51 = arith.select %29, %50, %49 : vector<16x100xi1>, vector<16x100xf32>
      %52 = arith.minimumf %44, %51 : vector<16x100xf32>
      %53 = arith.maximumf %44, %51 : vector<16x100xf32>
      %54 = arith.xori %29, %48 : vector<16x100xi1>
      %55 = arith.select %54, %53, %52 : vector<16x100xi1>, vector<16x100xf32>
      %c15_i32_29 = arith.constant 15 : i32
      %56 = tpu.dynamic_rotate %55 by %c15_i32_29 dim 0 : vector<16x100xf32>, i32 -> vector<16x100xf32>
      %c1_i32_30 = arith.constant 1 : i32
      %57 = tpu.dynamic_rotate %55 by %c1_i32_30 dim 0 : vector<16x100xf32>, i32 -> vector<16x100xf32>
      %58 = arith.select %25, %57, %56 : vector<16x100xi1>, vector<16x100xf32>
      %59 = arith.minimumf %55, %58 : vector<16x100xf32>
      %60 = arith.maximumf %55, %58 : vector<16x100xf32>
      %61 = arith.xori %25, %48 : vector<16x100xi1>
      %62 = arith.select %61, %60, %59 : vector<16x100xi1>, vector<16x100xf32>
      %c12_i32 = arith.constant 12 : i32
      %63 = tpu.dynamic_rotate %62 by %c12_i32 dim 0 : vector<16x100xf32>, i32 -> vector<16x100xf32>
      %c4_i32_31 = arith.constant 4 : i32
      %64 = tpu.dynamic_rotate %62 by %c4_i32_31 dim 0 : vector<16x100xf32>, i32 -> vector<16x100xf32>
      %65 = arith.select %33, %64, %63 : vector<16x100xi1>, vector<16x100xf32>
      %66 = arith.minimumf %62, %65 : vector<16x100xf32>
      %67 = arith.maximumf %62, %65 : vector<16x100xf32>
      %68 = arith.select %33, %67, %66 : vector<16x100xi1>, vector<16x100xf32>
      %c14_i32_32 = arith.constant 14 : i32
      %69 = tpu.dynamic_rotate %68 by %c14_i32_32 dim 0 : vector<16x100xf32>, i32 -> vector<16x100xf32>
      %c2_i32_33 = arith.constant 2 : i32
      %70 = tpu.dynamic_rotate %68 by %c2_i32_33 dim 0 : vector<16x100xf32>, i32 -> vector<16x100xf32>
      %71 = arith.select %29, %70, %69 : vector<16x100xi1>, vector<16x100xf32>
      %72 = arith.minimumf %68, %71 : vector<16x100xf32>
      %73 = arith.maximumf %68, %71 : vector<16x100xf32>
      %74 = arith.select %29, %73, %72 : vector<16x100xi1>, vector<16x100xf32>
      %c15_i32_34 = arith.constant 15 : i32
      %75 = tpu.dynamic_rotate %74 by %c15_i32_34 dim 0 : vector<16x100xf32>, i32 -> vector<16x100xf32>
      %c1_i32_35 = arith.constant 1 : i32
      %76 = tpu.dynamic_rotate %74 by %c1_i32_35 dim 0 : vector<16x100xf32>, i32 -> vector<16x100xf32>
      %77 = arith.select %25, %76, %75 : vector<16x100xi1>, vector<16x100xf32>
      %78 = arith.minimumf %74, %77 : vector<16x100xf32>
      %79 = arith.maximumf %74, %77 : vector<16x100xf32>
      %80 = arith.select %25, %79, %78 : vector<16x100xi1>, vector<16x100xf32>
      %81 = vector.extract_strided_slice %80 {offsets = [0, 0], sizes = [8, 100], strides = [1, 1]} : vector<16x100xf32> to vector<8x100xf32>
      %82 = vector.extract_strided_slice %80 {offsets = [8, 0], sizes = [8, 100], strides = [1, 1]} : vector<16x100xf32> to vector<8x100xf32>
      %83 = arith.subf %81, %82 : vector<8x100xf32>
      %84 = arith.mulf %83, %83 : vector<8x100xf32>
      %cst_36 = arith.constant dense<0.000000e+00> : vector<100xf32>
      %85 = vector.multi_reduction <add>, %84, %cst_36 [0] : vector<8x100xf32> to vector<100xf32>
      %86 = vector.shape_cast %85 : vector<100xf32> to vector<1x100xf32>
      %cst_37 = arith.constant dense<0xFF800000> : vector<1xf32>
      %87 = vector.multi_reduction <maximumf>, %86, %cst_37 [1] : vector<1x100xf32> to vector<1xf32>
      %88 = vector.shape_cast %87 : vector<1xf32> to vector<1x1xf32>
      %89 = vector.broadcast %88 : vector<1x1xf32> to vector<1x100xf32>
      %90 = arith.subf %86, %89 : vector<1x100xf32>
      %91 = math.exp %90 : vector<1x100xf32>
      %cst_38 = arith.constant dense<0.000000e+00> : vector<1xf32>
      %92 = vector.multi_reduction <add>, %91, %cst_38 [1] : vector<1x100xf32> to vector<1xf32>
      %93 = vector.shape_cast %92 : vector<1xf32> to vector<1x1xf32>
      %94 = arith.mulf %91, %86 : vector<1x100xf32>
      %cst_39 = arith.constant dense<0.000000e+00> : vector<1xf32>
      %95 = vector.multi_reduction <add>, %94, %cst_39 [1] : vector<1x100xf32> to vector<1xf32>
      %96 = vector.shape_cast %95 : vector<1xf32> to vector<1x1xf32>
      %cst_40 = arith.constant 8.000000e+00 : f32
      %97 = vector.broadcast %cst_40 : f32 to vector<1x1xf32>
      %98 = arith.mulf %93, %97 : vector<1x1xf32>
      %99 = arith.divf %96, %98 : vector<1x1xf32>
      %100 = math.sqrt %99 : vector<1x1xf32>
      %c0_41 = arith.constant 0 : index
      %c0_42 = arith.constant 0 : index
      %101 = vector.load %arg4[%c0_41, %c0_42] : memref<1x1xf32, #tpu.memory_space<vmem>>, vector<1x1xf32>
      tpu.vector_store %arg4[%c0_41, %c0_42], %100 {strides = array<i32>} : memref<1x1xf32, #tpu.memory_space<vmem>>, vector<1x1xf32>,
    } else {
    }
    return
  }
  func.func @transform_0(%arg0: i32) -> (i32, i32) {
    %c0_i32 = arith.constant 0 : i32
    %c0_i32_0 = arith.constant 0 : i32
    return %c0_i32, %arg0 : i32, i32
  }
  func.func @transform_1(%arg0: i32) -> (i32, i32) {
    %c0_i32 = arith.constant 0 : i32
    %c0_i32_0 = arith.constant 0 : i32
    return %c0_i32, %arg0 : i32, i32
  }
  func.func @transform_2(%arg0: i32) -> (i32, i32) {
    %c0_i32 = arith.constant 0 : i32
    %c0_i32_0 = arith.constant 0 : i32
    return %c0_i32, %arg0 : i32, i32
  }
  func.func @transform_3(%arg0: i32) -> (i32, i32) {
    %c0_i32 = arith.constant 0 : i32
    %c0_i32_0 = arith.constant 0 : i32
    %c0_i32_1 = arith.constant 0 : i32
    return %c0_i32, %c0_i32_0 : i32, i32
  }
}

</mosaic_0001>

<llo_original>
// kernel: tpu_custom_call.1
$region0: #{tpu_custom_call.1}
  #allocation0 [shape = 'u32[]', space=smem, size = 0x4, offset = 0x4, fixed_abs, tag = 'smem constant byte address 0x4 - core index']
  #allocation1 [shape = 'u32[144,128]{1,0:T(1,128)}', space=vmem, size = 0x12000, scoped, tag = 'internal scratch']
  #allocation2 [shape = 'f32[16,100]{1,0:T(8,128)}', space=vmem, size = 0x2000, scoped, tag = 'scratch operand']
  %s0 = inlined_call_operand.vmem [shape: f32[8,32], index: 0, kind: input, shape index: {}]
  %s1 = inlined_call_operand.vmem [shape: f32[8,32], index: 1, kind: input, shape index: {}]
  %s2 = inlined_call_operand.vmem [shape: f32[100,32], index: 2, kind: input, shape index: {}]
  %s3 = inlined_call_operand.hbm [shape: f32[1,1], index: 3, kind: output, shape index: {}]
  %s4 = sld [smem:[#allocation0]]
  $region30: #{tpu_custom_call.1} parent=0
    _
  %s6 = ssub.s32 1, %s4
  %s7 = scalar_select 0, %s6, %s4
  $region1: #{tpu_custom_call.1} parent=0
    #allocation3 [shape = 'u8[512]{0}', space=vmem, size = 0x400, scoped, tag = 'output window, operand 0, single buffered']
    #allocation4 [shape = 's32[1]{0}', space=sflag, size = 0x4, scoped, tag = 'scoped memory for tpu_custom_call.1']
    %8 = vsyncpa [#allocation4], 0
    // Predicated region
    $region2: #{tpu_custom_call.1} parent=1 // pred_check
      _
    $region3: #{tpu_custom_call.1} parent=1 // pred_check_branch
      %10 = sbr.rel (0) target = $region5
    $region4: #{tpu_custom_call.1} parent=1 // pred_region
      _
    $region5: #{tpu_custom_call.1} parent=1 // pred_fallthru
      _
    // Predicated region
    $region6: #{tpu_custom_call.1} parent=1 // pred_check
      _
    $region7: #{tpu_custom_call.1} parent=1 // pred_check_branch
      %12 = sbr.rel (0) target = $region9
    $region8: #{tpu_custom_call.1} parent=1 // pred_region
      _
    $region9: #{tpu_custom_call.1} parent=1 // pred_fallthru
      _
    // Predicated region
    $region10: #{tpu_custom_call.1} parent=1 // pred_check
      _
    $region11: #{tpu_custom_call.1} parent=1 // pred_check_branch
      %14 = sbr.rel (0) target = $region13
    $region12: #{tpu_custom_call.1} parent=1 // pred_region
      _
    $region13: #{tpu_custom_call.1} parent=1 // pred_fallthru
      _
    %p15 = scmp.eq.s32.totalorder 0, 0
    // Predicated region
    $region14: #{tpu_custom_call.1} parent=1 // pred_check
      %p16 = pneg %p15
    $region15: #{tpu_custom_call.1} parent=1 // pred_check_branch
      %18 = sbr.rel (%p16) target = $region17
    $region16: #{tpu_custom_call.1} parent=1 // pred_region
      %vm19 = vcmask 818176
      %20 = vst.msk [vmem:[#allocation2] sm:$0xff] %vm19, 0.0
      %21 = vst.msk [vmem:[#allocation2 + $0x8] sm:$0xff] %vm19, 0.0
    $region17: #{tpu_custom_call.1} parent=1 // pred_fallthru
      _
    %v22 = vld [vmem:[#allocation2] sm:$0xff]
    %v23 = vld [vmem:[%s0] sm:$0xff]
    %v24 = vld [vmem:[%s2] sm:$0xff]
    %v25 = vld [vmem:[%s2 + $0x8] sm:$0xff]
    %v26 = vld [vmem:[%s2 + $0x10] sm:$0xff]
    %v27 = vld [vmem:[%s2 + $0x18] sm:$0xff]
    %v28 = vld [vmem:[%s2 + $0x20] sm:$0xff]
    %v29 = vld [vmem:[%s2 + $0x28] sm:$0xff]
    %v30 = vld [vmem:[%s2 + $0x30] sm:$0xff]
    %v31 = vld [vmem:[%s2 + $0x38] sm:$0xff]
    %v32 = vld [vmem:[%s2 + $0x40] sm:$0xff]
    %v33 = vld [vmem:[%s2 + $0x48] sm:$0xff]
    %v34 = vld [vmem:[%s2 + $0x50] sm:$0xff]
    %v35 = vld [vmem:[%s2 + $0x58] sm:$0xff]
    %v36 = vld [vmem:[%s2 + $0x60] sm:$0xf]
    %vm37 = vcmask 261120
    %v39 = vsel %vm37, %v23, 0
    %v42 = vsel %vm37, %v24, 0
    %v45 = vsel %vm37, %v25, 0
    %v48 = vsel %vm37, %v26, 0
    %v51 = vsel %vm37, %v27, 0
    %v54 = vsel %vm37, %v28, 0
    %v57 = vsel %vm37, %v29, 0
    %v60 = vsel %vm37, %v30, 0
    %v63 = vsel %vm37, %v31, 0
    %v66 = vsel %vm37, %v32, 0
    %v69 = vsel %vm37, %v33, 0
    %v72 = vsel %vm37, %v34, 0
    %v75 = vsel %vm37, %v35, 0
    %v78 = vsel %vm37, %v36, 0
    %80 = vmatprep.subr.mxu0 0.0
    %81 = vmatpush1.xpose.msra.mxu0 %v42
    %82 = vmatprep.subr.mxu0 0.0
    %83 = vmatpush1.xpose.msra.mxu0 %v45
    %84 = vmatprep.subr.mxu0 0.0
    %85 = vmatpush1.xpose.msra.mxu0 %v48
    %86 = vmatprep.subr.mxu0 0.0
    %87 = vmatpush1.xpose.msra.mxu0 %v51
    %88 = vmatprep.subr.mxu0 0.0
    %89 = vmatpush1.xpose.msra.mxu0 %v54
    %90 = vmatprep.subr.mxu0 0.0
    %91 = vmatpush1.xpose.msra.mxu0 %v57
    %92 = vmatprep.subr.mxu0 0.0
    %93 = vmatpush1.xpose.msra.mxu0 %v60
    %94 = vmatprep.subr.mxu0 0.0
    %95 = vmatpush1.xpose.msra.mxu0 %v63
    %96 = vmatprep.subr.mxu0 0.0
    %97 = vmatpush1.xpose.msra.mxu0 %v66
    %98 = vmatprep.subr.mxu0 0.0
    %99 = vmatpush1.xpose.msra.mxu0 %v69
    %100 = vmatprep.subr.mxu0 0.0
    %101 = vmatpush1.xpose.msra.mxu0 %v72
    %102 = vmatprep.subr.mxu0 0.0
    %103 = vmatpush1.xpose.msra.mxu0 %v75
    %104 = vmatprep.subr.mxu0 0.0
    %105 = vmatpush1.xpose.msra.mxu0 %v78
    %106 = vmatprep.subr.mxu0 0.0
    %107 = vmatpush1.xpose.msra.mxu0 0.0
    %108 = vmatprep.subr.mxu0 0.0
    %109 = vmatpush1.xpose.msra.mxu0 0.0
    %110 = vmatprep.subr.mxu0 0.0
    %111 = vmatpush1.xpose.msra.mxu0 0.0
    %112 = vmatprep.subr.mxu0 0.0
    %113 = vmatpush1.xpose.msra.mxu0 0.0
    %114 = vmatprep.subr.mxu0 0.0
    %115 = vmatpush1.xpose.msra.mxu0 0.0
    %116 = vmatprep.subr.mxu0 0.0
    %117 = vmatpush1.xpose.msra.mxu0 0.0
    %118 = vmatprep.subr.mxu0 0.0
    %119 = vmatpush1.xpose.msra.mxu0 0.0
    %120 = vmatprep.subr.mxu0 0.0
    %121 = vmatpush1.xpose.msra.mxu0 0.0
    %122 = vmatprep.subr.mxu0 0.0
    %123 = vmatpush1.xpose.msra.mxu0 0.0
    %124 = vmatprep.subr.mxu0 0.0
    %125 = vmatpush1.xpose.msra.mxu0 0.0
    %126 = vmatprep.subr.mxu0 0.0
    %127 = vmatpush1.xpose.msra.mxu0 0.0
    %128 = vmatprep.subr.mxu0 0.0
    %129 = vmatpush1.xpose.msra.mxu0 0.0
    %130 = vmatprep.subr.mxu0 0.0
    %131 = vmatpush1.xpose.msra.mxu0 0.0
    %132 = vmatprep.subr.mxu0 0.0
    %133 = vmatpush1.xpose.msra.mxu0 0.0
    %134 = vmatprep.subr.mxu0 0.0
    %135 = vmatpush1.xpose.msra.mxu0 0.0
    %136 = vmatprep.subr.mxu0 0.0
    %137 = vmatpush1.xpose.msra.mxu0 0.0
    %138 = vmatprep.subr.mxu0 0.0
    %139 = vmatpush1.xpose.msra.mxu0 0.0
    %140 = vmatprep.subr.mxu0 0.0
    %141 = vmatpush1.xpose.msra.mxu0 0.0
    %142 = vmatprep.subr.mxu0 0.0
    %143 = vmatpush1.xpose.msra.mxu0 0.0
    %144 = vmatprep.mubr.f32.mxu0 0.0
    %145 = vmatmul.mubr.f32.gmra.mrb[0].mxu0 %v39
    %v146 = vpop.f32.mrb[0].mxu0
    %v147 = vadd.f32 0.0, %v146
    %v148 = vpop.f32.mrb[0].mxu0
    %149 = vdwg.mxu0
    %v150 = vadd.f32 %v22, %v147
    %vm151 = vcmask 818176
    %152 = vst.msk [vmem:[#allocation2] sm:$0xff] %vm151, %v150
    %v153 = vld [vmem:[#allocation2 + $0x8] sm:$0xff]
    %v154 = vld [vmem:[%s1] sm:$0xff]
    %v155 = vld [vmem:[%s2] sm:$0xff]
    %v156 = vld [vmem:[%s2 + $0x8] sm:$0xff]
    %v157 = vld [vmem:[%s2 + $0x10] sm:$0xff]
    %v158 = vld [vmem:[%s2 + $0x18] sm:$0xff]
    %v159 = vld [vmem:[%s2 + $0x20] sm:$0xff]
    %v160 = vld [vmem:[%s2 + $0x28] sm:$0xff]
    %v161 = vld [vmem:[%s2 + $0x30] sm:$0xff]
    %v162 = vld [vmem:[%s2 + $0x38] sm:$0xff]
    %v163 = vld [vmem:[%s2 + $0x40] sm:$0xff]
    %v164 = vld [vmem:[%s2 + $0x48] sm:$0xff]
    %v165 = vld [vmem:[%s2 + $0x50] sm:$0xff]
    %v166 = vld [vmem:[%s2 + $0x58] sm:$0xff]
    %v167 = vld [vmem:[%s2 + $0x60] sm:$0xf]
    %v169 = vsel %vm37, %v154, 0
    %v172 = vsel %vm37, %v155, 0
    %v175 = vsel %vm37, %v156, 0
    %v178 = vsel %vm37, %v157, 0
    %v181 = vsel %vm37, %v158, 0
    %v184 = vsel %vm37, %v159, 0
    %v187 = vsel %vm37, %v160, 0
    %v190 = vsel %vm37, %v161, 0
    %v193 = vsel %vm37, %v162, 0
    %v196 = vsel %vm37, %v163, 0
    %v199 = vsel %vm37, %v164, 0
    %v202 = vsel %vm37, %v165, 0
    %v205 = vsel %vm37, %v166, 0
    %v208 = vsel %vm37, %v167, 0
    %210 = vmatprep.subr.mxu0 0.0
    %211 = vmatpush1.xpose.msra.mxu0 %v172
    %212 = vmatprep.subr.mxu0 0.0
    %213 = vmatpush1.xpose.msra.mxu0 %v175
    %214 = vmatprep.subr.mxu0 0.0
    %215 = vmatpush1.xpose.msra.mxu0 %v178
    %216 = vmatprep.subr.mxu0 0.0
    %217 = vmatpush1.xpose.msra.mxu0 %v181
    %218 = vmatprep.subr.mxu0 0.0
    %219 = vmatpush1.xpose.msra.mxu0 %v184
    %220 = vmatprep.subr.mxu0 0.0
    %221 = vmatpush1.xpose.msra.mxu0 %v187
    %222 = vmatprep.subr.mxu0 0.0
    %223 = vmatpush1.xpose.msra.mxu0 %v190
    %224 = vmatprep.subr.mxu0 0.0
    %225 = vmatpush1.xpose.msra.mxu0 %v193
    %226 = vmatprep.subr.mxu0 0.0
    %227 = vmatpush1.xpose.msra.mxu0 %v196
    %228 = vmatprep.subr.mxu0 0.0
    %229 = vmatpush1.xpose.msra.mxu0 %v199
    %230 = vmatprep.subr.mxu0 0.0
    %231 = vmatpush1.xpose.msra.mxu0 %v202
    %232 = vmatprep.subr.mxu0 0.0
    %233 = vmatpush1.xpose.msra.mxu0 %v205
    %234 = vmatprep.subr.mxu0 0.0
    %235 = vmatpush1.xpose.msra.mxu0 %v208
    %236 = vmatprep.subr.mxu0 0.0
    %237 = vmatpush1.xpose.msra.mxu0 0.0
    %238 = vmatprep.subr.mxu0 0.0
    %239 = vmatpush1.xpose.msra.mxu0 0.0
    %240 = vmatprep.subr.mxu0 0.0
    %241 = vmatpush1.xpose.msra.mxu0 0.0
    %242 = vmatprep.subr.mxu0 0.0
    %243 = vmatpush1.xpose.msra.mxu0 0.0
    %244 = vmatprep.subr.mxu0 0.0
    %245 = vmatpush1.xpose.msra.mxu0 0.0
    %246 = vmatprep.subr.mxu0 0.0
    %247 = vmatpush1.xpose.msra.mxu0 0.0
    %248 = vmatprep.subr.mxu0 0.0
    %249 = vmatpush1.xpose.msra.mxu0 0.0
    %250 = vmatprep.subr.mxu0 0.0
    %251 = vmatpush1.xpose.msra.mxu0 0.0
    %252 = vmatprep.subr.mxu0 0.0
    %253 = vmatpush1.xpose.msra.mxu0 0.0
    %254 = vmatprep.subr.mxu0 0.0
    %255 = vmatpush1.xpose.msra.mxu0 0.0
    %256 = vmatprep.subr.mxu0 0.0
    %257 = vmatpush1.xpose.msra.mxu0 0.0
    %258 = vmatprep.subr.mxu0 0.0
    %259 = vmatpush1.xpose.msra.mxu0 0.0
    %260 = vmatprep.subr.mxu0 0.0
    %261 = vmatpush1.xpose.msra.mxu0 0.0
    %262 = vmatprep.subr.mxu0 0.0
    %263 = vmatpush1.xpose.msra.mxu0 0.0
    %264 = vmatprep.subr.mxu0 0.0
    %265 = vmatpush1.xpose.msra.mxu0 0.0
    %266 = vmatprep.subr.mxu0 0.0
    %267 = vmatpush1.xpose.msra.mxu0 0.0
    %268 = vmatprep.subr.mxu0 0.0
    %269 = vmatpush1.xpose.msra.mxu0 0.0
    %270 = vmatprep.subr.mxu0 0.0
    %271 = vmatpush1.xpose.msra.mxu0 0.0
    %272 = vmatprep.subr.mxu0 0.0
    %273 = vmatpush1.xpose.msra.mxu0 0.0
    %274 = vmatprep.mubr.f32.mxu0 0.0
    %275 = vmatmul.mubr.f32.gmra.mrb[0].mxu0 %v169
    %v276 = vpop.f32.mrb[0].mxu0
    %v277 = vadd.f32 0.0, %v276
    %v278 = vpop.f32.mrb[0].mxu0
    %279 = vdwg.mxu0
    %v280 = vadd.f32 %v153, %v277
    %281 = vst.msk [vmem:[#allocation2 + $0x8] sm:$0xff] %vm151, %v280
    // Predicated region
    $region18: #{tpu_custom_call.1} parent=1 // pred_check
      %p282 = pneg %p15
    $region19: #{tpu_custom_call.1} parent=1 // pred_check_branch
      %284 = sbr.rel (%p282) target = $region21
    $region20: #{tpu_custom_call.1} parent=1 // pred_region
      %v285 = vld [vmem:[#allocation2] sm:$0xff]
      %v286 = vld [vmem:[#allocation2 + $0x8] sm:$0xff]
      %v287 = vlaneseq
      %v288 = vshrl.u32 %v287, 7
      %v289 = vadd.s32 %v288, 8
      %v290 = vand.u32 %v288, 7
      %v291 = vand.u32 %v289, 7
      %v292 = vand.u32 %v290, 1
      %v293 = vand.u32 %v291, 1
      %vm294 = vcmp.ne.s32.totalorder %v292, 0
      %vm295 = vcmp.ne.s32.totalorder %v293, 0
      %v296 = vand.u32 %v290, 2
      %v297 = vand.u32 %v291, 2
      %vm298 = vcmp.ne.s32.totalorder %v296, 0
      %vm299 = vcmp.ne.s32.totalorder %v297, 0
      %v300 = vand.u32 %v290, 4
      %v301 = vand.u32 %v291, 4
      %vm302 = vcmp.ne.s32.totalorder %v300, 0
      %vm303 = vcmp.ne.s32.totalorder %v301, 0
      %v304 = vrot.slane %v285, 1
      %v305 = vrot.slane %v286, 1
      %vm306 = vcmp.lt.s32.totalorder %v288, 7
      %v307 = vsel %vm306, %v304, %v305
      %v308 = vsel %vm306, %v305, %v304
      %v309 = vrot.slane %v285, 7
      %v310 = vrot.slane %v286, 7
      %vm311 = vcmp.lt.s32.totalorder %v288, 1
      %v312 = vsel %vm311, %v309, %v310
      %v313 = vsel %vm311, %v310, %v309
      %v314 = vsel %vm294, %v313, %v307
      %v315 = vsel %vm295, %v312, %v308
      %v316 = vmin.f32 %v285, %v314
      %v317 = vmin.f32 %v286, %v315
      %v318 = vmax.f32 %v285, %v314
      %v319 = vmax.f32 %v286, %v315
      %vm320 = vmxor %vm294, %vm298
      %vm321 = vmxor %vm295, %vm299
      %v322 = vsel %vm320, %v318, %v316
      %v323 = vsel %vm321, %v319, %v317
      %v324 = vrot.slane %v322, 2
      %v325 = vrot.slane %v323, 2
      %vm326 = vcmp.lt.s32.totalorder %v288, 6
      %v327 = vsel %vm326, %v324, %v325
      %v328 = vsel %vm326, %v325, %v324
      %v329 = vrot.slane %v322, 6
      %v330 = vrot.slane %v323, 6
      %vm331 = vcmp.lt.s32.totalorder %v288, 2
      %v332 = vsel %vm331, %v329, %v330
      %v333 = vsel %vm331, %v330, %v329
      %v334 = vsel %vm298, %v333, %v327
      %v335 = vsel %vm299, %v332, %v328
      %v336 = vmin.f32 %v322, %v334
      %v337 = vmin.f32 %v323, %v335
      %v338 = vmax.f32 %v322, %v334
      %v339 = vmax.f32 %v323, %v335
      %vm340 = vmxor %vm298, %vm302
      %vm341 = vmxor %vm299, %vm303
      %v342 = vsel %vm340, %v338, %v336
      %v343 = vsel %vm341, %v339, %v337
      %v344 = vrot.slane %v342, 1
      %v345 = vrot.slane %v343, 1
      %v346 = vsel %vm306, %v344, %v345
      %v347 = vsel %vm306, %v345, %v344
      %v348 = vrot.slane %v342, 7
      %v349 = vrot.slane %v343, 7
      %v350 = vsel %vm311, %v348, %v349
      %v351 = vsel %vm311, %v349, %v348
      %v352 = vsel %vm294, %v351, %v346
      %v353 = vsel %vm295, %v350, %v347
      %v354 = vmin.f32 %v342, %v352
      %v355 = vmin.f32 %v343, %v353
      %v356 = vmax.f32 %v342, %v352
      %v357 = vmax.f32 %v343, %v353
      %vm358 = vmxor %vm294, %vm302
      %vm359 = vmxor %vm295, %vm303
      %v360 = vsel %vm358, %v356, %v354
      %v361 = vsel %vm359, %v357, %v355
      %v362 = vrot.slane %v360, 4
      %v363 = vrot.slane %v361, 4
      %vm364 = vcmp.lt.s32.totalorder %v288, 4
      %v365 = vsel %vm364, %v362, %v363
      %v366 = vsel %vm364, %v363, %v362
      %v367 = vsel %vm302, %v366, %v365
      %v368 = vsel %vm303, %v365, %v366
      %v369 = vmin.f32 %v360, %v367
      %v370 = vmin.f32 %v361, %v368
      %v371 = vmax.f32 %v360, %v367
      %v372 = vmax.f32 %v361, %v368
      %v373 = vsel %vm302, %v371, %v369
      %v374 = vsel %vm303, %v372, %v370
      %v375 = vrot.slane %v373, 2
      %v376 = vrot.slane %v374, 2
      %v377 = vsel %vm326, %v375, %v376
      %v378 = vsel %vm326, %v376, %v375
      %v379 = vrot.slane %v373, 6
      %v380 = vrot.slane %v374, 6
      %v381 = vsel %vm331, %v379, %v380
      %v382 = vsel %vm331, %v380, %v379
      %v383 = vsel %vm298, %v382, %v377
      %v384 = vsel %vm299, %v381, %v378
      %v385 = vmin.f32 %v373, %v383
      %v386 = vmin.f32 %v374, %v384
      %v387 = vmax.f32 %v373, %v383
      %v388 = vmax.f32 %v374, %v384
      %v389 = vsel %vm298, %v387, %v385
      %v390 = vsel %vm299, %v388, %v386
      %v391 = vrot.slane %v389, 1
      %v392 = vrot.slane %v390, 1
      %v393 = vsel %vm306, %v391, %v392
      %v394 = vsel %vm306, %v392, %v391
      %v395 = vrot.slane %v389, 7
      %v396 = vrot.slane %v390, 7
      %v397 = vsel %vm311, %v395, %v396
      %v398 = vsel %vm311, %v396, %v395
      %v399 = vsel %vm294, %v398, %v393
      %v400 = vsel %vm295, %v397, %v394
      %v401 = vmin.f32 %v389, %v399
      %v402 = vmin.f32 %v390, %v400
      %v403 = vmax.f32 %v389, %v399
      %v404 = vmax.f32 %v390, %v400
      %v405 = vsel %vm294, %v403, %v401
      %v406 = vsel %vm295, %v404, %v402
      %v407 = vsub.f32 %v405, %v406
      %v408 = vmul.f32 %v407, %v407
      %v409 = vsel %vm151, %v408, 0.0
      %v410 = vrot.slane %v409, 4
      %v411 = vadd.f32 %v409, %v410
      %v412 = vrot.slane %v411, 2
      %v413 = vadd.f32 %v411, %v412
      %v414 = vrot.slane %v413, 1
      %v415 = vadd.f32 %v413, %v414
      %v416 = vsel %vm151, %v415, -inf
      %417 = vmax.xlane.f32.xlu0 %v416
      %v418 = vpop.xlane.xlu0 %417
      %v419 = vsub.f32 %v415, %v418
      %v420 = vmul.f32 %v419, 1.442695
      %v421 = vpow.pop %v420
      %v422 = vsel %vm151, %v421, 0.0
      %423 = vadd.xlane.f32.xlu0 %v422
      %v424 = vpop.xlane.xlu0 %423
      %v425 = vmul.f32 %v421, %v415
      %v426 = vsel %vm151, %v425, 0.0
      %427 = vadd.xlane.f32.xlu0 %v426
      %v428 = vpop.xlane.xlu0 %427
      %v429 = vmul.f32 %v424, 8.0
      %v430 = vrcp.pop %v429
      %v431 = vmul.f32 %v428, %v430
      %v432 = vrsqrt.pop %v431
      %v433 = vmul.f32 %v431, %v432
      %vm434 = vcmp.eq.f32.partialorder %v431, inf
      %v435 = vsel %vm434, %v431, %v433
      %vm436 = vcmp.eq.f32.partialorder %v431, 0.0
      %v437 = vand.u32 %v431, 2147483648
      %v438 = vsel %vm436, %v437, %v435
      %vm439 = vcmask 0
      %440 = vst.msk [vmem:[#allocation3] sm:$0x1] %vm439, %v438
    $region21: #{tpu_custom_call.1} parent=1 // pred_fallthru
      _
    // Predicated region
    $region22: #{tpu_custom_call.1} parent=1 // pred_check
      _
    $region23: #{tpu_custom_call.1} parent=1 // pred_check_branch
      %442 = sbr.rel (0) target = $region25
    $region24: #{tpu_custom_call.1} parent=1 // pred_region
      %s444 = ssub.s32 16, 16
      %445 = vsyncadd [#allocation4], %s444
      %s447 = sshll.u32 [#allocation3], 4
      %s448 = int_to_ptr.vmem [resolvable:$true] %s447
      %450 = dma.vmem_to_hbm [thread:$0]  %s448, 16, %s3, [#allocation4]
    $region25: #{tpu_custom_call.1} parent=1 // pred_fallthru
      _
    // Predicated region
    $region26: #{tpu_custom_call.1} parent=1 // pred_check
      _
    $region27: #{tpu_custom_call.1} parent=1 // pred_check_branch
      %452 = sbr.rel (0) target = $region29
    $region28: #{tpu_custom_call.1} parent=1 // pred_region
      %453 = dma.done [#allocation4], 16
    $region29: #{tpu_custom_call.1} parent=1 // pred_fallthru
      _
    %454 = vsyncpa [#allocation4], 1

</llo_original>
